<compile_context>
chip_gen: v7x
topology: tpu7x:2x2x1
jax: 0.10.0
libtpu: 0.0.40
codegen_flags: <defaults>
</compile_context>

<pallas_src>
import functools

import jax
import jax.numpy as jnp
from jax.experimental import pallas as pl
from jax.experimental.pallas import tpu as pltpu


def se_kernel(x_ref, w1_ref, w2_ref, o_ref, *, inv_hw):
    # x_ref block: (Bt, C, HW)   w1_ref: (C, Cr)   w2_ref: (Cr, C)
    x = x_ref[...]                                           # native dtype
    # Global average pool: f32 accumulation folded into the lane reduction
    # (no full-tile f32 temporary is materialized).
    y = jnp.sum(x, axis=-1, dtype=jnp.float32) * inv_hw      # (Bt, C) f32
    w1 = w1_ref[...]
    w2 = w2_ref[...]
    # fc1 + ReLU : (Bt, C) @ (C, Cr) -> (Bt, Cr).  Feed the MXU in the weight
    # dtype (bf16 weights stay bf16) and accumulate in f32.
    h = jnp.dot(y.astype(w1.dtype), w1, preferred_element_type=jnp.float32)
    h = jnp.maximum(h, 0.0)
    # fc2 + sigmoid : (Bt, Cr) @ (Cr, C) -> (Bt, C)
    s = jnp.dot(h.astype(w2.dtype), w2, preferred_element_type=jnp.float32)
    s = jax.nn.sigmoid(s)
    # Scale input channels (broadcast over spatial) in the I/O dtype.
    o_ref[...] = (x * s.astype(x.dtype)[:, :, None]).astype(o_ref.dtype)


def _vmem_capacity_bytes():
    try:
        return int(pltpu.get_tpu_info().vmem_capacity_bytes)
    except Exception:
        # Conservative default if the query is unavailable.
        return 128 * 1024 * 1024


def selayer_pallas(x_nchw, w1, w2, *, bt=None):
    """SE layer forward.

    x_nchw : (B, C, H, W)
    w1     : (C, C//r)   == fc1.weight.T in PyTorch convention
    w2     : (C//r, C)   == fc2.weight.T in PyTorch convention
    bt     : optional explicit batch tile (used for testing partial blocks)
    """
    B, C, H, W = x_nchw.shape
    HW = H * W
    Cr = w1.shape[1]
    dtype = x_nchw.dtype
    itemsize = jnp.dtype(dtype).itemsize

    # Free, contiguous reshape (no HBM copy); no spatial/batch padding.
    x = x_nchw.reshape(B, C, HW)

    # ---- generation-gated tiling / VMEM budget -----------------------------
    vmem_cap = _vmem_capacity_bytes()
    small_vmem = vmem_cap <= 64 * 1024 * 1024        # v7x: 64 MiB per TC
    if small_vmem:
        block_budget_bytes = 6 * 1024 * 1024
        vmem_limit_bytes = 40 * 1024 * 1024
    else:                                            # v5e / v6e: 128 MiB, 1 TC
        block_budget_bytes = 16 * 1024 * 1024
        vmem_limit_bytes = 96 * 1024 * 1024

    if bt is None:
        bt_budget = max(1, block_budget_bytes // (C * HW * itemsize))
        Bt = min(B, bt_budget)
        if small_vmem and B >= 2:
            # Keep grid length >= 2 so both v7x TensorCores get work.
            # TODO(synk): verify in xprof that the "parallel" batch axis is
            # actually split across the two TCs; switch to pltpu.CORE_PARALLEL
            # if it is not.
            Bt = min(Bt, pl.cdiv(B, 2))
        Bt = max(Bt, 1)
    else:
        Bt = max(1, min(int(bt), B))

    # Partial last block (B % Bt != 0): padded reads, masked output writeback.
    grid = (pl.cdiv(B, Bt),)
    kernel = functools.partial(se_kernel, inv_hw=1.0 / HW)

    w_bytes = (C * Cr + Cr * C) * jnp.dtype(w1.dtype).itemsize
    cost = pl.CostEstimate(
        flops=2 * B * (C * Cr + Cr * C) + 2 * B * C * HW,
        transcendentals=B * C,
        bytes_accessed=2 * B * C * HW * itemsize + w_bytes,
    )

    out = pl.pallas_call(
        kernel,
        out_shape=jax.ShapeDtypeStruct((B, C, HW), dtype),
        grid_spec=pltpu.PrefetchScalarGridSpec(
            num_scalar_prefetch=0,
            grid=grid,
            in_specs=[
                pl.BlockSpec((Bt, C, HW), lambda b: (b, 0, 0)),
                pl.BlockSpec((C, Cr), lambda b: (0, 0)),
                pl.BlockSpec((Cr, C), lambda b: (0, 0)),
            ],
            out_specs=pl.BlockSpec((Bt, C, HW), lambda b: (b, 0, 0)),
        ),
        compiler_params=pltpu.CompilerParams(
            dimension_semantics=("parallel",),
            vmem_limit_bytes=vmem_limit_bytes,
        ),
        cost_estimate=cost,
    )(x, w1, w2)

    return out.reshape(B, C, H, W)


def selayer_ref(x_nchw, w1, w2):
    """Pure-JAX reference matching the PyTorch forward."""
    y = jnp.mean(x_nchw, axis=(2, 3))                       # (B, C)
    h = jnp.maximum(y @ w1, 0.0)                            # (B, C//r)
    s = jax.nn.sigmoid(h @ w2)                              # (B, C)
    return x_nchw * s[:, :, None, None]


if __name__ == "__main__":
    # Shapes consistent with the module: channel=32, reduction=16.
    B, C, H, W = 2, 32, 16, 16
    reduction = 16
    Cr = C // reduction

    key = jax.random.PRNGKey(0)
    kx, k1, k2 = jax.random.split(key, 3)
    x = jax.random.normal(kx, (B, C, H, W), dtype=jnp.float32)
    # Deterministic synthetic weights (Linear has no bias in this module).
    w1 = jax.random.normal(k1, (C, Cr), dtype=jnp.float32) * 0.1   # fc1.weight.T
    w2 = jax.random.normal(k2, (Cr, C), dtype=jnp.float32) * 0.1   # fc2.weight.T

    out = selayer_pallas(x, w1, w2)
    jax.block_until_ready(out)
    ref = selayer_ref(x, w1, w2)
    assert out.shape == (B, C, H, W)
    assert jnp.allclose(out, ref, atol=1e-5, rtol=1e-5), "mismatch vs reference"

    # Masked lane-tail path: HW=49 (7x7) is not a multiple of 128, no padding.
    x2 = jax.random.normal(kx, (B, C, 7, 7), dtype=jnp.float32)
    out2 = selayer_pallas(x2, w1, w2)
    jax.block_until_ready(out2)
    ref2 = selayer_ref(x2, w1, w2)
    assert jnp.allclose(out2, ref2, atol=1e-5, rtol=1e-5), "mismatch (lane tail)"

    # Partial last batch block path: B=3 with a forced Bt=2.
    x3 = jax.random.normal(k1, (3, C, 7, 7), dtype=jnp.float32)
    out3 = selayer_pallas(x3, w1, w2, bt=2)
    jax.block_until_ready(out3)
    ref3 = selayer_ref(x3, w1, w2)
    assert jnp.allclose(out3, ref3, atol=1e-5, rtol=1e-5), "mismatch (partial Bt)"

    print("KERNEL_OK")
</pallas_src>

<mosaic_0001>
module attributes {stable_mosaic.version = 11 : i64} {
  func.func @se_kernel(%arg0: i32, %arg1: memref<2x32x256xf32, #tpu.memory_space<vmem>>, %arg2: memref<32x2xf32, #tpu.memory_space<vmem>>, %arg3: memref<2x32xf32, #tpu.memory_space<vmem>>, %arg4: memref<2x32x256xf32, #tpu.memory_space<vmem>>) attributes {dimension_semantics = [#tpu.dimension_semantics<parallel>], iteration_bounds = array<i64: 1>, scalar_prefetch = 0 : i64, scratch_operands = 0 : i64, tpu.core_type = #tpu.core_type<tc>, window_params = [{transform_indices = @transform_0, window_bounds = array<i64: 2, 32, 256>}, {pipeline_mode = #tpu.pipeline_mode<synchronous>, transform_indices = @transform_1, window_bounds = array<i64: 32, 2>}, {pipeline_mode = #tpu.pipeline_mode<synchronous>, transform_indices = @transform_2, window_bounds = array<i64: 2, 32>}, {transform_indices = @transform_3, window_bounds = array<i64: 2, 32, 256>}]} {
    %c0 = arith.constant 0 : index
    %c0_0 = arith.constant 0 : index
    %c0_1 = arith.constant 0 : index
    %0 = vector.load %arg1[%c0, %c0_0, %c0_1] : memref<2x32x256xf32, #tpu.memory_space<vmem>>, vector<2x32x256xf32>
    %cst = arith.constant dense<0.000000e+00> : vector<2x32xf32>
    %1 = vector.multi_reduction <add>, %0, %cst [2] : vector<2x32x256xf32> to vector<2x32xf32>
    %cst_2 = arith.constant 3.906250e-03 : f32
    %2 = vector.broadcast %cst_2 : f32 to vector<2x32xf32>
    %3 = arith.mulf %1, %2 : vector<2x32xf32>
    %c0_3 = arith.constant 0 : index
    %c0_4 = arith.constant 0 : index
    %4 = vector.load %arg2[%c0_3, %c0_4] : memref<32x2xf32, #tpu.memory_space<vmem>>, vector<32x2xf32>
    %c0_5 = arith.constant 0 : index
    %c0_6 = arith.constant 0 : index
    %5 = vector.load %arg3[%c0_5, %c0_6] : memref<2x32xf32, #tpu.memory_space<vmem>>, vector<2x32xf32>
    %cst_7 = arith.constant dense<0.000000e+00> : vector<2x2xf32>
    %6 = tpu.matmul %3, %4, %cst_7 {dimension_numbers = #tpu.dot_dimension_numbers<[1], [0], [0], [1], [0, 0, 1, 1], [], []>} : vector<2x32xf32>, vector<32x2xf32>, vector<2x2xf32> -> vector<2x2xf32>
    %cst_8 = arith.constant 0.000000e+00 : f32
    %7 = vector.broadcast %cst_8 : f32 to vector<2x2xf32>
    %8 = arith.maximumf %6, %7 : vector<2x2xf32>
    %cst_9 = arith.constant dense<0.000000e+00> : vector<2x32xf32>
    %9 = tpu.matmul %8, %5, %cst_9 {dimension_numbers = #tpu.dot_dimension_numbers<[1], [0], [0], [1], [0, 0, 1, 1], [], []>} : vector<2x2xf32>, vector<2x32xf32>, vector<2x32xf32> -> vector<2x32xf32>
    %10 = arith.negf %9 : vector<2x32xf32>
    %11 = math.exp %10 : vector<2x32xf32>
    %cst_10 = arith.constant 1.000000e+00 : f32
    %12 = vector.broadcast %cst_10 : f32 to vector<2x32xf32>
    %13 = arith.addf %12, %11 : vector<2x32xf32>
    %14 = arith.divf %12, %13 : vector<2x32xf32>
    %15 = vector.shape_cast %14 : vector<2x32xf32> to vector<2x32x1xf32>
    %16 = vector.broadcast %15 : vector<2x32x1xf32> to vector<2x32x256xf32>
    %17 = arith.mulf %0, %16 : vector<2x32x256xf32>
    %c0_11 = arith.constant 0 : index
    %c0_12 = arith.constant 0 : index
    %c0_13 = arith.constant 0 : index
    %18 = vector.load %arg4[%c0_11, %c0_12, %c0_13] : memref<2x32x256xf32, #tpu.memory_space<vmem>>, vector<2x32x256xf32>
    tpu.vector_store %arg4[%c0_11, %c0_12, %c0_13], %17 {strides = array<i32>} : memref<2x32x256xf32, #tpu.memory_space<vmem>>, vector<2x32x256xf32>,
    return
  }
  func.func @transform_0(%arg0: i32) -> (i32, i32, i32) {
    %c0_i32 = arith.constant 0 : i32
    %c0_i32_0 = arith.constant 0 : i32
    %c0_i32_1 = arith.constant 0 : i32
    return %arg0, %c0_i32, %c0_i32_0 : i32, i32, i32
  }
  func.func @transform_1(%arg0: i32) -> (i32, i32) {
    %c0_i32 = arith.constant 0 : i32
    %c0_i32_0 = arith.constant 0 : i32
    %c0_i32_1 = arith.constant 0 : i32
    return %c0_i32, %c0_i32_0 : i32, i32
  }
  func.func @transform_2(%arg0: i32) -> (i32, i32) {
    %c0_i32 = arith.constant 0 : i32
    %c0_i32_0 = arith.constant 0 : i32
    %c0_i32_1 = arith.constant 0 : i32
    return %c0_i32, %c0_i32_0 : i32, i32
  }
  func.func @transform_3(%arg0: i32) -> (i32, i32, i32) {
    %c0_i32 = arith.constant 0 : i32
    %c0_i32_0 = arith.constant 0 : i32
    %c0_i32_1 = arith.constant 0 : i32
    return %arg0, %c0_i32, %c0_i32_0 : i32, i32, i32
  }
}

</mosaic_0001>

<llo_original>
// kernel: tpu_custom_call.1
$region0: #{tpu_custom_call.1}
  #allocation0 [shape = 'u32[]', space=smem, size = 0x4, offset = 0x4, fixed_abs, tag = 'smem constant byte address 0x4 - core index']
  #allocation1 [shape = 'u32[144,128]{1,0:T(1,128)}', space=vmem, size = 0x12000, scoped, tag = 'internal scratch']
  %s0 = inlined_call_operand.hbm [shape: f32[2,32,256], index: 0, kind: input, shape index: {}]
  %s1 = inlined_call_operand.hbm [shape: f32[32,2], index: 1, kind: input, shape index: {}]
  %s2 = inlined_call_operand.hbm [shape: f32[2,32], index: 2, kind: input, shape index: {}]
  %s3 = inlined_call_operand.hbm [shape: f32[2,32,256], index: 3, kind: output, shape index: {}]
  %s4 = sld [smem:[#allocation0]]
  $region34: #{tpu_custom_call.1} parent=0
    _
  %s6 = ssub.s32 1, %s4
  %s7 = scalar_select 0, %s6, %s4
  $region1: #{tpu_custom_call.1} parent=0
    #allocation2 [shape = 'u8[65536]{0}', space=vmem, size = 0x10000, scoped, tag = 'input window, operand 0, single buffered']
    #allocation3 [shape = 's32[1]{0}', space=sflag, size = 0x4, scoped, tag = 'scoped memory for tpu_custom_call.1']
    #allocation4 [shape = 's32[1]{0}', space=sflag, size = 0x4, scoped, tag = 'scoped memory for tpu_custom_call.1']
    #allocation5 [shape = 'u8[16384]{0}', space=vmem, size = 0x4000, scoped, tag = 'input window, operand 1, single buffered']
    #allocation6 [shape = 's32[1]{0}', space=sflag, size = 0x4, scoped, tag = 'scoped memory for tpu_custom_call.1']
    #allocation7 [shape = 'u8[1024]{0}', space=vmem, size = 0x400, scoped, tag = 'input window, operand 2, single buffered']
    #allocation8 [shape = 'u8[65536]{0}', space=vmem, size = 0x10000, scoped, tag = 'output window, operand 0, single buffered']
    %8 = vsyncpa [#allocation3], 0
    %9 = vsyncpa [#allocation6], 0
    %10 = vsyncpa [#allocation4], 0
    // Predicated region
    $region2: #{tpu_custom_call.1} parent=1 // pred_check
      _
    $region3: #{tpu_custom_call.1} parent=1 // pred_check_branch
      %12 = sbr.rel (0) target = $region5
    $region4: #{tpu_custom_call.1} parent=1 // pred_region
      %s14 = ssub.s32 2048, 2048
      %15 = vsyncadd [#allocation3], %s14
      %s16 = sshll.u32 [#allocation2], 4
      %s17 = int_to_ptr.vmem [resolvable:$true] %s16
      %22 = dma.hbm_to_vmem [thread:$0]  %s0, 2048, %s17, [#allocation3], 256, 256, 16
    $region5: #{tpu_custom_call.1} parent=1 // pred_fallthru
      _
    // Predicated region
    $region6: #{tpu_custom_call.1} parent=1 // pred_check
      _
    $region7: #{tpu_custom_call.1} parent=1 // pred_check_branch
      %24 = sbr.rel (0) target = $region9
    $region8: #{tpu_custom_call.1} parent=1 // pred_region
      %s26 = ssub.s32 512, 512
      %27 = vsyncadd [#allocation6], %s26
      %s28 = sshll.u32 [#allocation5], 4
      %s29 = int_to_ptr.vmem [resolvable:$true] %s28
      %34 = dma.hbm_to_vmem [thread:$0]  %s1, 512, %s29, [#allocation6], 128, 128, 8
    $region9: #{tpu_custom_call.1} parent=1 // pred_fallthru
      _
    // Predicated region
    $region10: #{tpu_custom_call.1} parent=1 // pred_check
      _
    $region11: #{tpu_custom_call.1} parent=1 // pred_check_branch
      %36 = sbr.rel (0) target = $region13
    $region12: #{tpu_custom_call.1} parent=1 // pred_region
      %s38 = ssub.s32 32, 32
      %39 = vsyncadd [#allocation6], %s38
      %s41 = sshll.u32 [#allocation7], 4
      %s42 = int_to_ptr.vmem [resolvable:$true] %s41
      %44 = dma.hbm_to_vmem [thread:$0]  %s2, 32, %s42, [#allocation6]
    $region13: #{tpu_custom_call.1} parent=1 // pred_fallthru
      _
    // Predicated region
    $region14: #{tpu_custom_call.1} parent=1 // pred_check
      _
    $region15: #{tpu_custom_call.1} parent=1 // pred_check_branch
      %46 = sbr.rel (0) target = $region17
    $region16: #{tpu_custom_call.1} parent=1 // pred_region
      %47 = dma.done [#allocation3], 2048
    $region17: #{tpu_custom_call.1} parent=1 // pred_fallthru
      _
    // Predicated region
    $region18: #{tpu_custom_call.1} parent=1 // pred_check
      _
    $region19: #{tpu_custom_call.1} parent=1 // pred_check_branch
      %49 = sbr.rel (0) target = $region21
    $region20: #{tpu_custom_call.1} parent=1 // pred_region
      %50 = dma.done [#allocation6], 512
    $region21: #{tpu_custom_call.1} parent=1 // pred_fallthru
      _
    // Predicated region
    $region22: #{tpu_custom_call.1} parent=1 // pred_check
      _
    $region23: #{tpu_custom_call.1} parent=1 // pred_check_branch
      %52 = sbr.rel (0) target = $region25
    $region24: #{tpu_custom_call.1} parent=1 // pred_region
      %53 = dma.done [#allocation6], 32
    $region25: #{tpu_custom_call.1} parent=1 // pred_fallthru
      _
    %v54 = vld [vmem:[#allocation2] sm:$0xff]
    %v55 = vld [vmem:[#allocation2 + $0x8] sm:$0xff]
    %v56 = vld [vmem:[#allocation2 + $0x10] sm:$0xff]
    %v57 = vld [vmem:[#allocation2 + $0x18] sm:$0xff]
    %v58 = vld [vmem:[#allocation2 + $0x20] sm:$0xff]
    %v59 = vld [vmem:[#allocation2 + $0x28] sm:$0xff]
    %v60 = vld [vmem:[#allocation2 + $0x30] sm:$0xff]
    %v61 = vld [vmem:[#allocation2 + $0x38] sm:$0xff]
    %v62 = vld [vmem:[#allocation2 + $0x40] sm:$0xff]
    %v63 = vld [vmem:[#allocation2 + $0x48] sm:$0xff]
    %v64 = vld [vmem:[#allocation2 + $0x50] sm:$0xff]
    %v65 = vld [vmem:[#allocation2 + $0x58] sm:$0xff]
    %v66 = vld [vmem:[#allocation2 + $0x60] sm:$0xff]
    %v67 = vld [vmem:[#allocation2 + $0x68] sm:$0xff]
    %v68 = vld [vmem:[#allocation2 + $0x70] sm:$0xff]
    %v69 = vld [vmem:[#allocation2 + $0x78] sm:$0xff]
    %v70 = vadd.f32 %v54, %v55
    %71 = vadd.xlane.f32.xlu0 %v70
    %v72 = vpop.xlane.xlu0 %71
    %v73 = vadd.f32 %v56, %v57
    %74 = vadd.xlane.f32.xlu0 %v73
    %v75 = vpop.xlane.xlu0 %74
    %v76 = vadd.f32 %v58, %v59
    %77 = vadd.xlane.f32.xlu0 %v76
    %v78 = vpop.xlane.xlu0 %77
    %v79 = vadd.f32 %v60, %v61
    %80 = vadd.xlane.f32.xlu0 %v79
    %v81 = vpop.xlane.xlu0 %80
    %v82 = vadd.f32 %v62, %v63
    %83 = vadd.xlane.f32.xlu0 %v82
    %v84 = vpop.xlane.xlu0 %83
    %v85 = vadd.f32 %v64, %v65
    %86 = vadd.xlane.f32.xlu0 %v85
    %v87 = vpop.xlane.xlu0 %86
    %v88 = vadd.f32 %v66, %v67
    %89 = vadd.xlane.f32.xlu0 %v88
    %v90 = vpop.xlane.xlu0 %89
    %v91 = vadd.f32 %v68, %v69
    %92 = vadd.xlane.f32.xlu0 %v91
    %v93 = vpop.xlane.xlu0 %92
    %v94 = vmul.f32 %v72, 0.00390625
    %v95 = vmul.f32 %v75, 0.00390625
    %v96 = vmul.f32 %v78, 0.00390625
    %v97 = vmul.f32 %v81, 0.00390625
    %v98 = vmul.f32 %v84, 0.00390625
    %v99 = vmul.f32 %v87, 0.00390625
    %v100 = vmul.f32 %v90, 0.00390625
    %v101 = vmul.f32 %v93, 0.00390625
    %v102 = vld [vmem:[#allocation5] sm:$0xff]
    %v103 = vld [vmem:[#allocation5 + $0x8] sm:$0xff]
    %v104 = vld [vmem:[#allocation5 + $0x10] sm:$0xff]
    %v105 = vld [vmem:[#allocation5 + $0x18] sm:$0xff]
    %v106 = vld [vmem:[#allocation7] sm:$0x3]
    %v115 = vlaneseq
    %v116 = vand.u32 %v115, 127
    %v117 = vlaneseq
    %v118 = vshrl.u32 %v117, 7
    %v119 = vsub.s32 %v116, %v118
    %v120 = vrot.slane %v94, %v119
    %v121 = vadd.s32 %v116, 4294967288
    %v122 = vlaneseq
    %v123 = vshrl.u32 %v122, 7
    %v124 = vsub.s32 %v121, %v123
    %v125 = vrot.slane %v95, %v124
    %vm126 = vcmask 130112
    %v127 = vsel %vm126, %v125, %v120
    %v128 = vadd.s32 %v116, 4294967280
    %v129 = vlaneseq
    %v130 = vshrl.u32 %v129, 7
    %v131 = vsub.s32 %v128, %v130
    %v132 = vrot.slane %v96, %v131
    %vm133 = vcmask 195712
    %v134 = vsel %vm133, %v132, %v127
    %v135 = vadd.s32 %v116, 4294967272
    %v136 = vlaneseq
    %v137 = vshrl.u32 %v136, 7
    %v138 = vsub.s32 %v135, %v137
    %v139 = vrot.slane %v97, %v138
    %vm140 = vcmask 261312
    %v141 = vsel %vm140, %v139, %v134
    %v142 = vlaneseq
    %v143 = vshrl.u32 %v142, 7
    %v144 = vsub.s32 %v116, %v143
    %v145 = vrot.slane %v98, %v144
    %v146 = vlaneseq
    %v147 = vshrl.u32 %v146, 7
    %v148 = vsub.s32 %v121, %v147
    %v149 = vrot.slane %v99, %v148
    %v150 = vsel %vm126, %v149, %v145
    %v151 = vlaneseq
    %v152 = vshrl.u32 %v151, 7
    %v153 = vsub.s32 %v128, %v152
    %v154 = vrot.slane %v100, %v153
    %v155 = vsel %vm133, %v154, %v150
    %v156 = vlaneseq
    %v157 = vshrl.u32 %v156, 7
    %v158 = vsub.s32 %v135, %v157
    %v159 = vrot.slane %v101, %v158
    %v160 = vsel %vm140, %v159, %v155
    %vm161 = vcmask 1041409
    %v162 = vsel %vm161, %v160, %v141
    %vm163 = vcmask 261120
    %v164 = vsel %vm163, %v162, 0
    %166 = vmatprep.subr.mxu0 0.0
    %167 = vmatpush1.msra.mxu0 %v102
    %168 = vmatprep.subr.mxu0 0.0
    %169 = vmatpush1.msra.mxu0 %v103
    %170 = vmatprep.subr.mxu0 0.0
    %171 = vmatpush1.msra.mxu0 %v104
    %172 = vmatprep.subr.mxu0 0.0
    %173 = vmatpush1.msra.mxu0 %v105
    %174 = vmatprep.subr.mxu0 0.0
    %175 = vmatpush1.msra.mxu0 0.0
    %176 = vmatprep.subr.mxu0 0.0
    %177 = vmatpush1.msra.mxu0 0.0
    %178 = vmatprep.subr.mxu0 0.0
    %179 = vmatpush1.msra.mxu0 0.0
    %180 = vmatprep.subr.mxu0 0.0
    %181 = vmatpush1.msra.mxu0 0.0
    %182 = vmatprep.subr.mxu0 0.0
    %183 = vmatpush1.msra.mxu0 0.0
    %184 = vmatprep.subr.mxu0 0.0
    %185 = vmatpush1.msra.mxu0 0.0
    %186 = vmatprep.subr.mxu0 0.0
    %187 = vmatpush1.msra.mxu0 0.0
    %188 = vmatprep.subr.mxu0 0.0
    %189 = vmatpush1.msra.mxu0 0.0
    %190 = vmatprep.subr.mxu0 0.0
    %191 = vmatpush1.msra.mxu0 0.0
    %192 = vmatprep.subr.mxu0 0.0
    %193 = vmatpush1.msra.mxu0 0.0
    %194 = vmatprep.subr.mxu0 0.0
    %195 = vmatpush1.msra.mxu0 0.0
    %196 = vmatprep.subr.mxu0 0.0
    %197 = vmatpush1.msra.mxu0 0.0
    %198 = vmatprep.subr.mxu0 0.0
    %199 = vmatpush1.msra.mxu0 0.0
    %200 = vmatprep.subr.mxu0 0.0
    %201 = vmatpush1.msra.mxu0 0.0
    %202 = vmatprep.subr.mxu0 0.0
    %203 = vmatpush1.msra.mxu0 0.0
    %204 = vmatprep.subr.mxu0 0.0
    %205 = vmatpush1.msra.mxu0 0.0
    %206 = vmatprep.subr.mxu0 0.0
    %207 = vmatpush1.msra.mxu0 0.0
    %208 = vmatprep.subr.mxu0 0.0
    %209 = vmatpush1.msra.mxu0 0.0
    %210 = vmatprep.subr.mxu0 0.0
    %211 = vmatpush1.msra.mxu0 0.0
    %212 = vmatprep.subr.mxu0 0.0
    %213 = vmatpush1.msra.mxu0 0.0
    %214 = vmatprep.subr.mxu0 0.0
    %215 = vmatpush1.msra.mxu0 0.0
    %216 = vmatprep.subr.mxu0 0.0
    %217 = vmatpush1.msra.mxu0 0.0
    %218 = vmatprep.subr.mxu0 0.0
    %219 = vmatpush1.msra.mxu0 0.0
    %220 = vmatprep.subr.mxu0 0.0
    %221 = vmatpush1.msra.mxu0 0.0
    %222 = vmatprep.subr.mxu0 0.0
    %223 = vmatpush1.msra.mxu0 0.0
    %224 = vmatprep.subr.mxu0 0.0
    %225 = vmatpush1.msra.mxu0 0.0
    %226 = vmatprep.subr.mxu0 0.0
    %227 = vmatpush1.msra.mxu0 0.0
    %228 = vmatprep.subr.mxu0 0.0
    %229 = vmatpush1.msra.mxu0 0.0
    %230 = vmatprep.mubr.f32.mxu0 0.0
    %231 = vmatmul.mubr.f32.gmra.mrb[0].mxu0 %v164
    %v232 = vpop.f32.mrb[0].mxu0
    %v233 = vadd.f32 0.0, %v232
    %v234 = vpop.f32.mrb[0].mxu0
    %235 = vdwg.mxu0
    %v236 = vmax.f32 %v233, 0.0
    %vm237 = vcmask 15360
    %v239 = vsel %vm237, %v236, 0
    %vm241 = vcmask 1041408
    %v243 = vsel %vm241, %v106, 0
    %245 = vmatprep.subr.mxu0 0.0
    %246 = vmatpush1.msra.mxu0 %v243
    %247 = vmatprep.subr.mxu0 0.0
    %248 = vmatpush1.msra.mxu0 0.0
    %249 = vmatprep.subr.mxu0 0.0
    %250 = vmatpush1.msra.mxu0 0.0
    %251 = vmatprep.subr.mxu0 0.0
    %252 = vmatpush1.msra.mxu0 0.0
    %253 = vmatprep.subr.mxu0 0.0
    %254 = vmatpush1.msra.mxu0 0.0
    %255 = vmatprep.subr.mxu0 0.0
    %256 = vmatpush1.msra.mxu0 0.0
    %257 = vmatprep.subr.mxu0 0.0
    %258 = vmatpush1.msra.mxu0 0.0
    %259 = vmatprep.subr.mxu0 0.0
    %260 = vmatpush1.msra.mxu0 0.0
    %261 = vmatprep.subr.mxu0 0.0
    %262 = vmatpush1.msra.mxu0 0.0
    %263 = vmatprep.subr.mxu0 0.0
    %264 = vmatpush1.msra.mxu0 0.0
    %265 = vmatprep.subr.mxu0 0.0
    %266 = vmatpush1.msra.mxu0 0.0
    %267 = vmatprep.subr.mxu0 0.0
    %268 = vmatpush1.msra.mxu0 0.0
    %269 = vmatprep.subr.mxu0 0.0
    %270 = vmatpush1.msra.mxu0 0.0
    %271 = vmatprep.subr.mxu0 0.0
    %272 = vmatpush1.msra.mxu0 0.0
    %273 = vmatprep.subr.mxu0 0.0
    %274 = vmatpush1.msra.mxu0 0.0
    %275 = vmatprep.subr.mxu0 0.0
    %276 = vmatpush1.msra.mxu0 0.0
    %277 = vmatprep.subr.mxu0 0.0
    %278 = vmatpush1.msra.mxu0 0.0
    %279 = vmatprep.subr.mxu0 0.0
    %280 = vmatpush1.msra.mxu0 0.0
    %281 = vmatprep.subr.mxu0 0.0
    %282 = vmatpush1.msra.mxu0 0.0
    %283 = vmatprep.subr.mxu0 0.0
    %284 = vmatpush1.msra.mxu0 0.0
    %285 = vmatprep.subr.mxu0 0.0
    %286 = vmatpush1.msra.mxu0 0.0
    %287 = vmatprep.subr.mxu0 0.0
    %288 = vmatpush1.msra.mxu0 0.0
    %289 = vmatprep.subr.mxu0 0.0
    %290 = vmatpush1.msra.mxu0 0.0
    %291 = vmatprep.subr.mxu0 0.0
    %292 = vmatpush1.msra.mxu0 0.0
    %293 = vmatprep.subr.mxu0 0.0
    %294 = vmatpush1.msra.mxu0 0.0
    %295 = vmatprep.subr.mxu0 0.0
    %296 = vmatpush1.msra.mxu0 0.0
    %297 = vmatprep.subr.mxu0 0.0
    %298 = vmatpush1.msra.mxu0 0.0
    %299 = vmatprep.subr.mxu0 0.0
    %300 = vmatpush1.msra.mxu0 0.0
    %301 = vmatprep.subr.mxu0 0.0
    %302 = vmatpush1.msra.mxu0 0.0
    %303 = vmatprep.subr.mxu0 0.0
    %304 = vmatpush1.msra.mxu0 0.0
    %305 = vmatprep.subr.mxu0 0.0
    %306 = vmatpush1.msra.mxu0 0.0
    %307 = vmatprep.subr.mxu0 0.0
    %308 = vmatpush1.msra.mxu0 0.0
    %309 = vmatprep.mubr.f32.mxu0 0.0
    %310 = vmatmul.mubr.f32.gmra.mrb[0].mxu0 %v239
    %v311 = vpop.f32.mrb[0].mxu0
    %v312 = vadd.f32 0.0, %v311
    %v313 = vpop.f32.mrb[0].mxu0
    %314 = vdwg.mxu0
    %v315 = vxor.u32 %v312, 2147483648
    %v316 = vmul.f32 %v315, 1.442695
    %v317 = vpow.pop %v316
    %v318 = vadd.f32 %v317, 1.0
    %v319 = vrcp.pop %v318
    %v320 = vmul.f32 1.0, %v319
    %v321 = vlaneseq
    %v322 = vshrl.u32 %v321, 7
    %v323 = vsub.s32 0, %v322
    %v324 = vrot.slane %v320, %v323
    %326 = vbcast.lane.b32.xlu0 %v324, 256
    %v327 = vpop.permute.xlu0 %326
    %s329 = sor.u32 256, 8
    %330 = vbcast.lane.b32.xlu0 %v324, %s329
    %v331 = vpop.permute.xlu0 %330
    %s333 = sor.u32 256, 16
    %334 = vbcast.lane.b32.xlu0 %v324, %s333
    %v335 = vpop.permute.xlu0 %334
    %s337 = sor.u32 256, 24
    %338 = vbcast.lane.b32.xlu0 %v324, %s337
    %v339 = vpop.permute.xlu0 %338
    %v340 = vlaneseq
    %v341 = vshrl.u32 %v340, 7
    %v342 = vsub.s32 1, %v341
    %v343 = vrot.slane %v320, %v342
    %345 = vbcast.lane.b32.xlu0 %v343, 256
    %v346 = vpop.permute.xlu0 %345
    %s348 = sor.u32 256, 8
    %349 = vbcast.lane.b32.xlu0 %v343, %s348
    %v350 = vpop.permute.xlu0 %349
    %s352 = sor.u32 256, 16
    %353 = vbcast.lane.b32.xlu0 %v343, %s352
    %v354 = vpop.permute.xlu0 %353
    %s356 = sor.u32 256, 24
    %357 = vbcast.lane.b32.xlu0 %v343, %s356
    %v358 = vpop.permute.xlu0 %357
    %v359 = vmul.f32 %v54, %v327
    %v360 = vmul.f32 %v55, %v327
    %v361 = vmul.f32 %v56, %v331
    %v362 = vmul.f32 %v57, %v331
    %v363 = vmul.f32 %v58, %v335
    %v364 = vmul.f32 %v59, %v335
    %v365 = vmul.f32 %v60, %v339
    %v366 = vmul.f32 %v61, %v339
    %v367 = vmul.f32 %v62, %v346
    %v368 = vmul.f32 %v63, %v346
    %v369 = vmul.f32 %v64, %v350
    %v370 = vmul.f32 %v65, %v350
    %v371 = vmul.f32 %v66, %v354
    %v372 = vmul.f32 %v67, %v354
    %v373 = vmul.f32 %v68, %v358
    %v374 = vmul.f32 %v69, %v358
    %375 = vst [vmem:[#allocation8] sm:$0xff] %v359
    %376 = vst [vmem:[#allocation8 + $0x8] sm:$0xff] %v360
    %377 = vst [vmem:[#allocation8 + $0x10] sm:$0xff] %v361
    %378 = vst [vmem:[#allocation8 + $0x18] sm:$0xff] %v362
    %379 = vst [vmem:[#allocation8 + $0x20] sm:$0xff] %v363
    %380 = vst [vmem:[#allocation8 + $0x28] sm:$0xff] %v364
    %381 = vst [vmem:[#allocation8 + $0x30] sm:$0xff] %v365
    %382 = vst [vmem:[#allocation8 + $0x38] sm:$0xff] %v366
    %383 = vst [vmem:[#allocation8 + $0x40] sm:$0xff] %v367
    %384 = vst [vmem:[#allocation8 + $0x48] sm:$0xff] %v368
    %385 = vst [vmem:[#allocation8 + $0x50] sm:$0xff] %v369
    %386 = vst [vmem:[#allocation8 + $0x58] sm:$0xff] %v370
    %387 = vst [vmem:[#allocation8 + $0x60] sm:$0xff] %v371
    %388 = vst [vmem:[#allocation8 + $0x68] sm:$0xff] %v372
    %389 = vst [vmem:[#allocation8 + $0x70] sm:$0xff] %v373
    %390 = vst [vmem:[#allocation8 + $0x78] sm:$0xff] %v374
    // Predicated region
    $region26: #{tpu_custom_call.1} parent=1 // pred_check
      _
    $region27: #{tpu_custom_call.1} parent=1 // pred_check_branch
      %392 = sbr.rel (0) target = $region29
    $region28: #{tpu_custom_call.1} parent=1 // pred_region
      %s394 = ssub.s32 2048, 2048
      %395 = vsyncadd [#allocation4], %s394
      %s396 = sshll.u32 [#allocation8], 4
      %s397 = int_to_ptr.vmem [resolvable:$true] %s396
      %402 = dma.vmem_to_hbm [thread:$0]  %s397, 2048, %s3, [#allocation4], 256, 256, 16
    $region29: #{tpu_custom_call.1} parent=1 // pred_fallthru
      _
    // Predicated region
    $region30: #{tpu_custom_call.1} parent=1 // pred_check
      _
    $region31: #{tpu_custom_call.1} parent=1 // pred_check_branch
      %404 = sbr.rel (0) target = $region33
    $region32: #{tpu_custom_call.1} parent=1 // pred_region
      %405 = dma.done [#allocation4], 2048
    $region33: #{tpu_custom_call.1} parent=1 // pred_fallthru
      _
    %406 = vsyncpa [#allocation3], 1
    %407 = vsyncpa [#allocation6], 1
    %408 = vsyncpa [#allocation4], 1

</llo_original>
